<compile_context>
chip_gen: v7x
topology: tpu7x:2x2x1
jax: 0.10.0
libtpu: 0.0.40
codegen_flags: <defaults>
</compile_context>

<pallas_src>
import numpy as np
import jax
import jax.numpy as jnp
from jax.experimental import pallas as pl
from jax.experimental.pallas import tpu as pltpu


def _round_up(x, m):
    return ((x + m - 1) // m) * m


def _mlp_kernel(x_ref, w1_ref, b1_ref, w2_ref, b2_ref, w3_ref, b3_ref, o_ref):
    # x arrives as f32 directly from HBM (no wrapper cast/copy); cast the tile
    # to bf16 right before the MXU feed.
    x = x_ref[...].astype(jnp.bfloat16)

    # Layer 1: Linear(D, 256) + ReLU      (Dropout(0.2) = identity, eval mode)
    # bf16 x bf16 -> f32 accumulate on the MXU; minimal epilogue (bias+ReLU).
    h1 = jnp.dot(x, w1_ref[...], preferred_element_type=jnp.float32)
    h1 = jnp.maximum(h1 + b1_ref[...], 0.0)

    # Layer 2: Linear(256, 128) + ReLU    (Dropout(0.1) = identity, eval mode)
    h2 = jnp.dot(h1.astype(jnp.bfloat16), w2_ref[...],
                 preferred_element_type=jnp.float32)
    h2 = jnp.maximum(h2 + b2_ref[...], 0.0)

    # Layer 3: Linear(128, num_classes)   (num_classes zero-padded to 128 lanes)
    out = jnp.dot(h2.astype(jnp.bfloat16), w3_ref[...],
                  preferred_element_type=jnp.float32)
    o_ref[...] = (out + b3_ref[...]).astype(o_ref.dtype)


def prepare_params(params):
    """One-time dtype prep (do at model-load time, NOT per forward):
    bf16 weights (MXU-native operands), f32 biases (f32 epilogue add)."""
    w1, b1, w2, b2, w3, b3 = params
    return (w1.astype(jnp.bfloat16), b1.astype(jnp.float32),
            w2.astype(jnp.bfloat16), b2.astype(jnp.float32),
            w3.astype(jnp.bfloat16), b3.astype(jnp.float32))


def transfer_classifier_forward(x, prepared_params, *, num_classes, tb=512,
                                out_dtype=jnp.bfloat16, return_padded=False):
    """x: (B, input_dim) float32. prepared_params: output of prepare_params().
    Returns logits (B, num_classes) in out_dtype (bf16 by default),
    or the (B, 128) lane-padded slab if return_padded=True."""
    w1b, b1f, w2b, b2f, w3b, b3f = prepared_params
    B, D = x.shape
    H1 = w1b.shape[1]          # 256
    H2 = w2b.shape[1]          # 128
    C_pad = w3b.shape[1]       # 128 (padded num_classes)

    # Batch tiling:
    #  * B <= 256: single block with row dim == B (block dim equal to the full
    #    array dim is always layout-legal, no padding needed).
    #  * B  > 256: >= 2 "parallel" grid steps (keeps both v7x TensorCores fed),
    #    tile rows a multiple of 16 (bf16-native sublane packing), capped at tb.
    #    The last block may be partial; Pallas masks it (per-row independence
    #    means garbage rows never contaminate valid rows and their output rows
    #    are dropped on writeback).
    if B <= 256:
        tb_eff = B
    else:
        tb_eff = min(tb, _round_up((B + 1) // 2, 16))
    grid = (pl.cdiv(B, tb_eff),)

    # Advisory cost estimate for the XLA scheduler.
    flops = 2 * B * (D * H1 + H1 * H2 + H2 * C_pad)
    bytes_accessed = (
        B * D * 4                                    # x (f32, read once)
        + (D * H1 + H1 * H2 + H2 * C_pad) * 2        # weights (bf16)
        + (H1 + H2 + C_pad) * 4                      # biases (f32)
        + B * C_pad * np.dtype(out_dtype).itemsize   # logits
    )
    cost = pl.CostEstimate(flops=flops, transcendentals=0,
                           bytes_accessed=bytes_accessed)

    out = pl.pallas_call(
        _mlp_kernel,
        out_shape=jax.ShapeDtypeStruct((B, C_pad), out_dtype),
        grid_spec=pltpu.PrefetchScalarGridSpec(
            num_scalar_prefetch=0,
            grid=grid,
            in_specs=[
                pl.BlockSpec((tb_eff, D), lambda i: (i, 0)),   # x tile (f32)
                pl.BlockSpec((D, H1), lambda i: (0, 0)),       # W1 (resident)
                pl.BlockSpec((1, H1), lambda i: (0, 0)),       # b1
                pl.BlockSpec((H1, H2), lambda i: (0, 0)),      # W2
                pl.BlockSpec((1, H2), lambda i: (0, 0)),       # b2
                pl.BlockSpec((H2, C_pad), lambda i: (0, 0)),   # W3 (padded)
                pl.BlockSpec((1, C_pad), lambda i: (0, 0)),    # b3 (padded)
            ],
            out_specs=pl.BlockSpec((tb_eff, C_pad), lambda i: (i, 0)),
        ),
        compiler_params=pltpu.CompilerParams(
            dimension_semantics=("parallel",)),
        cost_estimate=cost,
    )(x, w1b, b1f, w2b, b2f, w3b, b3f)

    if return_padded:
        return out                      # (B, 128) padded lanes, no slice copy
    return out[:, :num_classes]


def init_params(key, input_dim=1024, num_classes=10, c_pad=128):
    """Deterministic synthetic parameters (PyTorch Linear init, stored (in,out))."""
    ks = jax.random.split(key, 6)
    scale1 = 1.0 / jnp.sqrt(input_dim)
    scale2 = 1.0 / jnp.sqrt(256.0)
    scale3 = 1.0 / jnp.sqrt(128.0)
    w1 = jax.random.uniform(ks[0], (input_dim, 256), jnp.float32, -scale1, scale1)
    b1 = jax.random.uniform(ks[1], (1, 256), jnp.float32, -scale1, scale1)
    w2 = jax.random.uniform(ks[2], (256, 128), jnp.float32, -scale2, scale2)
    b2 = jax.random.uniform(ks[3], (1, 128), jnp.float32, -scale2, scale2)
    w3 = jax.random.uniform(ks[4], (128, num_classes), jnp.float32, -scale3, scale3)
    b3 = jax.random.uniform(ks[5], (1, num_classes), jnp.float32, -scale3, scale3)
    # zero-pad the final layer to c_pad output lanes for lane-dense stores
    w3p = jnp.zeros((128, c_pad), jnp.float32).at[:, :num_classes].set(w3)
    b3p = jnp.zeros((1, c_pad), jnp.float32).at[:, :num_classes].set(b3)
    return (w1, b1, w2, b2, w3p, b3p)


def reference_forward(x, params, num_classes):
    """Pure-JAX reference mimicking the kernel's bf16 cast points (f32 accumulate)."""
    w1, b1, w2, b2, w3, b3 = params
    f32 = jnp.float32
    bf = jnp.bfloat16
    xb = x.astype(bf).astype(f32)
    w1f = w1.astype(bf).astype(f32)
    w2f = w2.astype(bf).astype(f32)
    w3f = w3.astype(bf).astype(f32)
    h = jnp.maximum(xb @ w1f + b1, 0.0)
    h = h.astype(bf).astype(f32)
    h = jnp.maximum(h @ w2f + b2, 0.0)
    h = h.astype(bf).astype(f32)
    return (h @ w3f + b3)[:, :num_classes]


if __name__ == "__main__":
    key = jax.random.PRNGKey(0)
    k_x, k_p, k_x2, k_x3 = jax.random.split(key, 4)

    INPUT_DIM, NUM_CLASSES = 1024, 10
    params = init_params(k_p, input_dim=INPUT_DIM, num_classes=NUM_CLASSES)
    pparams = prepare_params(params)     # one-time bf16/f32 dtype prep

    # Small batch: single full-batch block.
    B = 8
    x = jax.random.normal(k_x, (B, INPUT_DIM), jnp.float32)
    out = jax.block_until_ready(
        transfer_classifier_forward(x, pparams, num_classes=NUM_CLASSES))
    ref = reference_forward(x, params, NUM_CLASSES)
    assert out.shape == (B, NUM_CLASSES)
    assert jnp.allclose(out.astype(jnp.float32), ref, atol=2e-2, rtol=2e-2)

    # Non-sublane-multiple small batch (block row dim == full array dim path).
    B2 = 12
    x2 = jax.random.normal(k_x2, (B2, INPUT_DIM), jnp.float32)
    out2 = jax.block_until_ready(
        transfer_classifier_forward(x2, pparams, num_classes=NUM_CLASSES))
    ref2 = reference_forward(x2, params, NUM_CLASSES)
    assert out2.shape == (B2, NUM_CLASSES)
    assert jnp.allclose(out2.astype(jnp.float32), ref2, atol=2e-2, rtol=2e-2)

    # Larger batch: multi-step parallel grid with a masked partial last block
    # (exercises the no-jnp.pad path and the >=2-step v7x gating).
    B3 = 300
    x3 = jax.random.normal(k_x3, (B3, INPUT_DIM), jnp.float32)
    out3 = jax.block_until_ready(
        transfer_classifier_forward(x3, pparams, num_classes=NUM_CLASSES))
    ref3 = reference_forward(x3, params, NUM_CLASSES)
    assert out3.shape == (B3, NUM_CLASSES)
    assert jnp.allclose(out3.astype(jnp.float32), ref3, atol=2e-2, rtol=2e-2)

    print("KERNEL_OK")
</pallas_src>

<mosaic_0001>
module attributes {stable_mosaic.version = 11 : i64} {
  func.func @_mlp_kernel(%arg0: i32, %arg1: memref<8x1024xf32, #tpu.memory_space<vmem>>, %arg2: memref<1024x256xbf16, #tpu.memory_space<vmem>>, %arg3: memref<1x256xf32, #tpu.memory_space<vmem>>, %arg4: memref<256x128xbf16, #tpu.memory_space<vmem>>, %arg5: memref<1x128xf32, #tpu.memory_space<vmem>>, %arg6: memref<128x128xbf16, #tpu.memory_space<vmem>>, %arg7: memref<1x128xf32, #tpu.memory_space<vmem>>, %arg8: memref<8x128xbf16, #tpu.memory_space<vmem>>) attributes {dimension_semantics = [#tpu.dimension_semantics<parallel>], iteration_bounds = array<i64: 1>, scalar_prefetch = 0 : i64, scratch_operands = 0 : i64, tpu.core_type = #tpu.core_type<tc>, window_params = [{transform_indices = @transform_0, window_bounds = array<i64: 8, 1024>}, {pipeline_mode = #tpu.pipeline_mode<synchronous>, transform_indices = @transform_1, window_bounds = array<i64: 1024, 256>}, {pipeline_mode = #tpu.pipeline_mode<synchronous>, transform_indices = @transform_2, window_bounds = array<i64: 1, 256>}, {pipeline_mode = #tpu.pipeline_mode<synchronous>, transform_indices = @transform_3, window_bounds = array<i64: 256, 128>}, {pipeline_mode = #tpu.pipeline_mode<synchronous>, transform_indices = @transform_4, window_bounds = array<i64: 1, 128>}, {pipeline_mode = #tpu.pipeline_mode<synchronous>, transform_indices = @transform_5, window_bounds = array<i64: 128, 128>}, {pipeline_mode = #tpu.pipeline_mode<synchronous>, transform_indices = @transform_6, window_bounds = array<i64: 1, 128>}, {transform_indices = @transform_7, window_bounds = array<i64: 8, 128>}]} {
    %c0 = arith.constant 0 : index
    %c0_0 = arith.constant 0 : index
    %0 = vector.load %arg1[%c0, %c0_0] : memref<8x1024xf32, #tpu.memory_space<vmem>>, vector<8x1024xf32>
    %1 = arith.truncf %0 : vector<8x1024xf32> to vector<8x1024xbf16>
    %c0_1 = arith.constant 0 : index
    %c0_2 = arith.constant 0 : index
    %2 = vector.load %arg2[%c0_1, %c0_2] : memref<1024x256xbf16, #tpu.memory_space<vmem>>, vector<1024x256xbf16>
    %cst = arith.constant dense<0.000000e+00> : vector<8x256xf32>
    %3 = tpu.matmul %1, %2, %cst {dimension_numbers = #tpu.dot_dimension_numbers<[1], [0], [0], [1], [0, 0, 1, 1], [], []>} : vector<8x1024xbf16>, vector<1024x256xbf16>, vector<8x256xf32> -> vector<8x256xf32>
    %c0_3 = arith.constant 0 : index
    %c0_4 = arith.constant 0 : index
    %4 = vector.load %arg3[%c0_3, %c0_4] : memref<1x256xf32, #tpu.memory_space<vmem>>, vector<1x256xf32>
    %5 = vector.broadcast %4 : vector<1x256xf32> to vector<8x256xf32>
    %6 = arith.addf %3, %5 : vector<8x256xf32>
    %cst_5 = arith.constant 0.000000e+00 : f32
    %7 = vector.broadcast %cst_5 : f32 to vector<8x256xf32>
    %8 = arith.maximumf %6, %7 : vector<8x256xf32>
    %9 = arith.truncf %8 : vector<8x256xf32> to vector<8x256xbf16>
    %c0_6 = arith.constant 0 : index
    %c0_7 = arith.constant 0 : index
    %10 = vector.load %arg4[%c0_6, %c0_7] : memref<256x128xbf16, #tpu.memory_space<vmem>>, vector<256x128xbf16>
    %cst_8 = arith.constant dense<0.000000e+00> : vector<8x128xf32>
    %11 = tpu.matmul %9, %10, %cst_8 {dimension_numbers = #tpu.dot_dimension_numbers<[1], [0], [0], [1], [0, 0, 1, 1], [], []>} : vector<8x256xbf16>, vector<256x128xbf16>, vector<8x128xf32> -> vector<8x128xf32>
    %c0_9 = arith.constant 0 : index
    %c0_10 = arith.constant 0 : index
    %12 = vector.load %arg5[%c0_9, %c0_10] : memref<1x128xf32, #tpu.memory_space<vmem>>, vector<1x128xf32>
    %13 = vector.broadcast %12 : vector<1x128xf32> to vector<8x128xf32>
    %14 = arith.addf %11, %13 : vector<8x128xf32>
    %cst_11 = arith.constant 0.000000e+00 : f32
    %15 = vector.broadcast %cst_11 : f32 to vector<8x128xf32>
    %16 = arith.maximumf %14, %15 : vector<8x128xf32>
    %17 = arith.truncf %16 : vector<8x128xf32> to vector<8x128xbf16>
    %c0_12 = arith.constant 0 : index
    %c0_13 = arith.constant 0 : index
    %18 = vector.load %arg6[%c0_12, %c0_13] : memref<128x128xbf16, #tpu.memory_space<vmem>>, vector<128x128xbf16>
    %cst_14 = arith.constant dense<0.000000e+00> : vector<8x128xf32>
    %19 = tpu.matmul %17, %18, %cst_14 {dimension_numbers = #tpu.dot_dimension_numbers<[1], [0], [0], [1], [0, 0, 1, 1], [], []>} : vector<8x128xbf16>, vector<128x128xbf16>, vector<8x128xf32> -> vector<8x128xf32>
    %c0_15 = arith.constant 0 : index
    %c0_16 = arith.constant 0 : index
    %20 = vector.load %arg7[%c0_15, %c0_16] : memref<1x128xf32, #tpu.memory_space<vmem>>, vector<1x128xf32>
    %21 = vector.broadcast %20 : vector<1x128xf32> to vector<8x128xf32>
    %22 = arith.addf %19, %21 : vector<8x128xf32>
    %23 = arith.truncf %22 : vector<8x128xf32> to vector<8x128xbf16>
    %c0_17 = arith.constant 0 : index
    %c0_18 = arith.constant 0 : index
    %24 = vector.load %arg8[%c0_17, %c0_18] : memref<8x128xbf16, #tpu.memory_space<vmem>>, vector<8x128xbf16>
    tpu.vector_store %arg8[%c0_17, %c0_18], %23 {strides = array<i32>} : memref<8x128xbf16, #tpu.memory_space<vmem>>, vector<8x128xbf16>,
    return
  }
  func.func @transform_0(%arg0: i32) -> (i32, i32) {
    %c0_i32 = arith.constant 0 : i32
    %c0_i32_0 = arith.constant 0 : i32
    return %arg0, %c0_i32 : i32, i32
  }
  func.func @transform_1(%arg0: i32) -> (i32, i32) {
    %c0_i32 = arith.constant 0 : i32
    %c0_i32_0 = arith.constant 0 : i32
    %c0_i32_1 = arith.constant 0 : i32
    return %c0_i32, %c0_i32_0 : i32, i32
  }
  func.func @transform_2(%arg0: i32) -> (i32, i32) {
    %c0_i32 = arith.constant 0 : i32
    %c0_i32_0 = arith.constant 0 : i32
    %c0_i32_1 = arith.constant 0 : i32
    return %c0_i32, %c0_i32_0 : i32, i32
  }
  func.func @transform_3(%arg0: i32) -> (i32, i32) {
    %c0_i32 = arith.constant 0 : i32
    %c0_i32_0 = arith.constant 0 : i32
    %c0_i32_1 = arith.constant 0 : i32
    return %c0_i32, %c0_i32_0 : i32, i32
  }
  func.func @transform_4(%arg0: i32) -> (i32, i32) {
    %c0_i32 = arith.constant 0 : i32
    %c0_i32_0 = arith.constant 0 : i32
    %c0_i32_1 = arith.constant 0 : i32
    return %c0_i32, %c0_i32_0 : i32, i32
  }
  func.func @transform_5(%arg0: i32) -> (i32, i32) {
    %c0_i32 = arith.constant 0 : i32
    %c0_i32_0 = arith.constant 0 : i32
    %c0_i32_1 = arith.constant 0 : i32
    return %c0_i32, %c0_i32_0 : i32, i32
  }
  func.func @transform_6(%arg0: i32) -> (i32, i32) {
    %c0_i32 = arith.constant 0 : i32
    %c0_i32_0 = arith.constant 0 : i32
    %c0_i32_1 = arith.constant 0 : i32
    return %c0_i32, %c0_i32_0 : i32, i32
  }
  func.func @transform_7(%arg0: i32) -> (i32, i32) {
    %c0_i32 = arith.constant 0 : i32
    %c0_i32_0 = arith.constant 0 : i32
    return %arg0, %c0_i32 : i32, i32
  }
}

</mosaic_0001>

<llo_original>
// kernel: tpu_custom_call.1
$region0: #{tpu_custom_call.1}
  #allocation0 [shape = 'u32[]', space=smem, size = 0x4, offset = 0x4, fixed_abs, tag = 'smem constant byte address 0x4 - core index']
  #allocation1 [shape = 'u32[144,128]{1,0:T(1,128)}', space=vmem, size = 0x12000, scoped, tag = 'internal scratch']
  %s0 = inlined_call_operand.hbm [shape: f32[8,1024], index: 0, kind: input, shape index: {}]
  %s1 = inlined_call_operand.hbm [shape: bf16[1024,256], index: 1, kind: input, shape index: {}]
  %s2 = inlined_call_operand.vmem [shape: f32[1,256], index: 2, kind: input, shape index: {}]
  %s3 = inlined_call_operand.hbm [shape: bf16[256,128], index: 3, kind: input, shape index: {}]
  %s4 = inlined_call_operand.vmem [shape: f32[1,128], index: 4, kind: input, shape index: {}]
  %s5 = inlined_call_operand.hbm [shape: bf16[128,128], index: 5, kind: input, shape index: {}]
  %s6 = inlined_call_operand.vmem [shape: f32[1,128], index: 6, kind: input, shape index: {}]
  %s7 = inlined_call_operand.hbm [shape: bf16[8,128], index: 7, kind: output, shape index: {}]
  %s8 = sld [smem:[#allocation0]]
  $region54: #{tpu_custom_call.1} parent=0
    _
  %s10 = ssub.s32 1, %s8
  %s11 = scalar_select 0, %s10, %s8
  $region1: #{tpu_custom_call.1} parent=0
    #allocation2 [shape = 'u8[32768]{0}', space=vmem, size = 0x8000, scoped, tag = 'input window, operand 0, single buffered']
    #allocation3 [shape = 's32[1]{0}', space=sflag, size = 0x4, scoped, tag = 'scoped memory for tpu_custom_call.1']
    #allocation4 [shape = 's32[1]{0}', space=sflag, size = 0x4, scoped, tag = 'scoped memory for tpu_custom_call.1']
    #allocation5 [shape = 'u8[524288]{0}', space=vmem, size = 0x80000, scoped, tag = 'input window, operand 1, single buffered']
    #allocation6 [shape = 's32[1]{0}', space=sflag, size = 0x4, scoped, tag = 'scoped memory for tpu_custom_call.1']
    #allocation7 [shape = 'u8[65536]{0}', space=vmem, size = 0x10000, scoped, tag = 'input window, operand 3, single buffered']
    #allocation8 [shape = 'u8[32768]{0}', space=vmem, size = 0x8000, scoped, tag = 'input window, operand 5, single buffered']
    #allocation9 [shape = 's32[1]{0}', space=sflag, size = 0x4, scoped, tag = 'scoped memory for tpu_custom_call.1']
    #allocation10 [shape = 'u8[2048]{0}', space=vmem, size = 0x800, scoped, tag = 'output window, operand 0, single buffered']
    %12 = vsyncpa [#allocation3], 0
    %13 = vsyncpa [#allocation6], 0
    %14 = vsyncpa [#allocation9], 0
    %15 = vsyncpa [#allocation4], 0
    // Predicated region
    $region2: #{tpu_custom_call.1} parent=1 // pred_check
      _
    $region3: #{tpu_custom_call.1} parent=1 // pred_check_branch
      %17 = sbr.rel (0) target = $region5
    $region4: #{tpu_custom_call.1} parent=1 // pred_region
      %s19 = ssub.s32 1024, 1024
      %20 = vsyncadd [#allocation3], %s19
      %s22 = sshll.u32 [#allocation2], 4
      %s23 = int_to_ptr.vmem [resolvable:$true] %s22
      %25 = dma.hbm_to_vmem [thread:$0]  %s0, 1024, %s23, [#allocation3]
    $region5: #{tpu_custom_call.1} parent=1 // pred_fallthru
      _
    // Predicated region
    $region6: #{tpu_custom_call.1} parent=1 // pred_check
      _
    $region7: #{tpu_custom_call.1} parent=1 // pred_check_branch
      %27 = sbr.rel (0) target = $region9
    $region8: #{tpu_custom_call.1} parent=1 // pred_region
      %s29 = ssub.s32 16384, 16384
      %30 = vsyncadd [#allocation6], %s29
      %s31 = sshll.u32 [#allocation5], 4
      %s32 = int_to_ptr.vmem [resolvable:$true] %s31
      %37 = dma.hbm_to_vmem [thread:$0]  %s1, 16384, %s32, [#allocation6], 128, 128, 8
    $region9: #{tpu_custom_call.1} parent=1 // pred_fallthru
      _
    // Predicated region
    $region10: #{tpu_custom_call.1} parent=1 // pred_check
      _
    $region11: #{tpu_custom_call.1} parent=1 // pred_check_branch
      %39 = sbr.rel (0) target = $region13
    $region12: #{tpu_custom_call.1} parent=1 // pred_region
      _
    $region13: #{tpu_custom_call.1} parent=1 // pred_fallthru
      _
    // Predicated region
    $region14: #{tpu_custom_call.1} parent=1 // pred_check
      _
    $region15: #{tpu_custom_call.1} parent=1 // pred_check_branch
      %41 = sbr.rel (0) target = $region17
    $region16: #{tpu_custom_call.1} parent=1 // pred_region
      %s43 = ssub.s32 2048, 2048
      %44 = vsyncadd [#allocation6], %s43
      %s45 = sshll.u32 [#allocation7], 4
      %s46 = int_to_ptr.vmem [resolvable:$true] %s45
      %51 = dma.hbm_to_vmem [thread:$0]  %s3, 2048, %s46, [#allocation6], 64, 64, 4
    $region17: #{tpu_custom_call.1} parent=1 // pred_fallthru
      _
    // Predicated region
    $region18: #{tpu_custom_call.1} parent=1 // pred_check
      _
    $region19: #{tpu_custom_call.1} parent=1 // pred_check_branch
      %53 = sbr.rel (0) target = $region21
    $region20: #{tpu_custom_call.1} parent=1 // pred_region
      _
    $region21: #{tpu_custom_call.1} parent=1 // pred_fallthru
      _
    // Predicated region
    $region22: #{tpu_custom_call.1} parent=1 // pred_check
      _
    $region23: #{tpu_custom_call.1} parent=1 // pred_check_branch
      %55 = sbr.rel (0) target = $region25
    $region24: #{tpu_custom_call.1} parent=1 // pred_region
      %s57 = ssub.s32 1024, 1024
      %58 = vsyncadd [#allocation9], %s57
      %s59 = sshll.u32 [#allocation8], 4
      %s60 = int_to_ptr.vmem [resolvable:$true] %s59
      %65 = dma.hbm_to_vmem [thread:$0]  %s5, 1024, %s60, [#allocation9], 64, 64, 4
    $region25: #{tpu_custom_call.1} parent=1 // pred_fallthru
      _
    // Predicated region
    $region26: #{tpu_custom_call.1} parent=1 // pred_check
      _
    $region27: #{tpu_custom_call.1} parent=1 // pred_check_branch
      %67 = sbr.rel (0) target = $region29
    $region28: #{tpu_custom_call.1} parent=1 // pred_region
      _
    $region29: #{tpu_custom_call.1} parent=1 // pred_fallthru
      _
    // Predicated region
    $region30: #{tpu_custom_call.1} parent=1 // pred_check
      _
    $region31: #{tpu_custom_call.1} parent=1 // pred_check_branch
      %69 = sbr.rel (0) target = $region33
    $region32: #{tpu_custom_call.1} parent=1 // pred_region
      %70 = dma.done [#allocation3], 1024
    $region33: #{tpu_custom_call.1} parent=1 // pred_fallthru
      _
    // Predicated region
    $region34: #{tpu_custom_call.1} parent=1 // pred_check
      _
    $region35: #{tpu_custom_call.1} parent=1 // pred_check_branch
      %72 = sbr.rel (0) target = $region37
    $region36: #{tpu_custom_call.1} parent=1 // pred_region
      %73 = dma.done [#allocation6], 16384
    $region37: #{tpu_custom_call.1} parent=1 // pred_fallthru
      _
    // Predicated region
    $region38: #{tpu_custom_call.1} parent=1 // pred_check
      _
    $region39: #{tpu_custom_call.1} parent=1 // pred_check_branch
      %75 = sbr.rel (0) target = $region41
    $region40: #{tpu_custom_call.1} parent=1 // pred_region
      %76 = dma.done [#allocation6], 2048
    $region41: #{tpu_custom_call.1} parent=1 // pred_fallthru
      _
    // Predicated region
    $region42: #{tpu_custom_call.1} parent=1 // pred_check
      _
    $region43: #{tpu_custom_call.1} parent=1 // pred_check_branch
      %78 = sbr.rel (0) target = $region45
    $region44: #{tpu_custom_call.1} parent=1 // pred_region
      %79 = dma.done [#allocation9], 1024
    $region45: #{tpu_custom_call.1} parent=1 // pred_fallthru
      _
    %v81 = vld [vmem:[#allocation2] sm:$0xff]
    %v82 = vld [vmem:[#allocation2 + $0x8] sm:$0xff]
    %v83 = vld [vmem:[#allocation2 + $0x10] sm:$0xff]
    %v84 = vld [vmem:[#allocation2 + $0x18] sm:$0xff]
    %v85 = vld [vmem:[#allocation2 + $0x20] sm:$0xff]
    %v86 = vld [vmem:[#allocation2 + $0x28] sm:$0xff]
    %v87 = vld [vmem:[#allocation2 + $0x30] sm:$0xff]
    %v88 = vld [vmem:[#allocation2 + $0x38] sm:$0xff]
    %v89 = vpack.c.bf16 %v81, %v81
    %v90 = vpack.c.bf16 %v82, %v82
    %v91 = vpack.c.bf16 %v83, %v83
    %v92 = vpack.c.bf16 %v84, %v84
    %v93 = vpack.c.bf16 %v85, %v85
    %v94 = vpack.c.bf16 %v86, %v86
    %v95 = vpack.c.bf16 %v87, %v87
    %v96 = vpack.c.bf16 %v88, %v88
    %v97 = vld [vmem:[#allocation5] sm:$0xff]
    %v98 = vld [vmem:[#allocation5 + $0x8] sm:$0xff]
    %v99 = vld [vmem:[#allocation5 + $0x10] sm:$0xff]
    %v100 = vld [vmem:[#allocation5 + $0x18] sm:$0xff]
    %v101 = vld [vmem:[#allocation5 + $0x20] sm:$0xff]
    %v102 = vld [vmem:[#allocation5 + $0x28] sm:$0xff]
    %v103 = vld [vmem:[#allocation5 + $0x30] sm:$0xff]
    %v104 = vld [vmem:[#allocation5 + $0x38] sm:$0xff]
    %v105 = vld [vmem:[#allocation5 + $0x40] sm:$0xff]
    %v106 = vld [vmem:[#allocation5 + $0x48] sm:$0xff]
    %v107 = vld [vmem:[#allocation5 + $0x50] sm:$0xff]
    %v108 = vld [vmem:[#allocation5 + $0x58] sm:$0xff]
    %v109 = vld [vmem:[#allocation5 + $0x60] sm:$0xff]
    %v110 = vld [vmem:[#allocation5 + $0x68] sm:$0xff]
    %v111 = vld [vmem:[#allocation5 + $0x70] sm:$0xff]
    %v112 = vld [vmem:[#allocation5 + $0x78] sm:$0xff]
    %v113 = vld [vmem:[#allocation5 + $0x80] sm:$0xff]
    %v114 = vld [vmem:[#allocation5 + $0x88] sm:$0xff]
    %v115 = vld [vmem:[#allocation5 + $0x90] sm:$0xff]
    %v116 = vld [vmem:[#allocation5 + $0x98] sm:$0xff]
    %v117 = vld [vmem:[#allocation5 + $0xa0] sm:$0xff]
    %v118 = vld [vmem:[#allocation5 + $0xa8] sm:$0xff]
    %v119 = vld [vmem:[#allocation5 + $0xb0] sm:$0xff]
    %v120 = vld [vmem:[#allocation5 + $0xb8] sm:$0xff]
    %v121 = vld [vmem:[#allocation5 + $0xc0] sm:$0xff]
    %v122 = vld [vmem:[#allocation5 + $0xc8] sm:$0xff]
    %v123 = vld [vmem:[#allocation5 + $0xd0] sm:$0xff]
    %v124 = vld [vmem:[#allocation5 + $0xd8] sm:$0xff]
    %v125 = vld [vmem:[#allocation5 + $0xe0] sm:$0xff]
    %v126 = vld [vmem:[#allocation5 + $0xe8] sm:$0xff]
    %v127 = vld [vmem:[#allocation5 + $0xf0] sm:$0xff]
    %v128 = vld [vmem:[#allocation5 + $0xf8] sm:$0xff]
    %v129 = vld [vmem:[#allocation5 + $0x100] sm:$0xff]
    %v130 = vld [vmem:[#allocation5 + $0x108] sm:$0xff]
    %v131 = vld [vmem:[#allocation5 + $0x110] sm:$0xff]
    %v132 = vld [vmem:[#allocation5 + $0x118] sm:$0xff]
    %v133 = vld [vmem:[#allocation5 + $0x120] sm:$0xff]
    %v134 = vld [vmem:[#allocation5 + $0x128] sm:$0xff]
    %v135 = vld [vmem:[#allocation5 + $0x130] sm:$0xff]
    %v136 = vld [vmem:[#allocation5 + $0x138] sm:$0xff]
    %v137 = vld [vmem:[#allocation5 + $0x140] sm:$0xff]
    %v138 = vld [vmem:[#allocation5 + $0x148] sm:$0xff]
    %v139 = vld [vmem:[#allocation5 + $0x150] sm:$0xff]
    %v140 = vld [vmem:[#allocation5 + $0x158] sm:$0xff]
    %v141 = vld [vmem:[#allocation5 + $0x160] sm:$0xff]
    %v142 = vld [vmem:[#allocation5 + $0x168] sm:$0xff]
    %v143 = vld [vmem:[#allocation5 + $0x170] sm:$0xff]
    %v144 = vld [vmem:[#allocation5 + $0x178] sm:$0xff]
    %v145 = vld [vmem:[#allocation5 + $0x180] sm:$0xff]
    %v146 = vld [vmem:[#allocation5 + $0x188] sm:$0xff]
    %v147 = vld [vmem:[#allocation5 + $0x190] sm:$0xff]
    %v148 = vld [vmem:[#allocation5 + $0x198] sm:$0xff]
    %v149 = vld [vmem:[#allocation5 + $0x1a0] sm:$0xff]
    %v150 = vld [vmem:[#allocation5 + $0x1a8] sm:$0xff]
    %v151 = vld [vmem:[#allocation5 + $0x1b0] sm:$0xff]
    %v152 = vld [vmem:[#allocation5 + $0x1b8] sm:$0xff]
    %v153 = vld [vmem:[#allocation5 + $0x1c0] sm:$0xff]
    %v154 = vld [vmem:[#allocation5 + $0x1c8] sm:$0xff]
    %v155 = vld [vmem:[#allocation5 + $0x1d0] sm:$0xff]
    %v156 = vld [vmem:[#allocation5 + $0x1d8] sm:$0xff]
    %v157 = vld [vmem:[#allocation5 + $0x1e0] sm:$0xff]
    %v158 = vld [vmem:[#allocation5 + $0x1e8] sm:$0xff]
    %v159 = vld [vmem:[#allocation5 + $0x1f0] sm:$0xff]
    %v160 = vld [vmem:[#allocation5 + $0x1f8] sm:$0xff]
    %v161 = vld [vmem:[#allocation5 + $0x200] sm:$0xff]
    %v162 = vld [vmem:[#allocation5 + $0x208] sm:$0xff]
    %v163 = vld [vmem:[#allocation5 + $0x210] sm:$0xff]
    %v164 = vld [vmem:[#allocation5 + $0x218] sm:$0xff]
    %v165 = vld [vmem:[#allocation5 + $0x220] sm:$0xff]
    %v166 = vld [vmem:[#allocation5 + $0x228] sm:$0xff]
    %v167 = vld [vmem:[#allocation5 + $0x230] sm:$0xff]
    %v168 = vld [vmem:[#allocation5 + $0x238] sm:$0xff]
    %v169 = vld [vmem:[#allocation5 + $0x240] sm:$0xff]
    %v170 = vld [vmem:[#allocation5 + $0x248] sm:$0xff]
    %v171 = vld [vmem:[#allocation5 + $0x250] sm:$0xff]
    %v172 = vld [vmem:[#allocation5 + $0x258] sm:$0xff]
    %v173 = vld [vmem:[#allocation5 + $0x260] sm:$0xff]
    %v174 = vld [vmem:[#allocation5 + $0x268] sm:$0xff]
    %v175 = vld [vmem:[#allocation5 + $0x270] sm:$0xff]
    %v176 = vld [vmem:[#allocation5 + $0x278] sm:$0xff]
    %v177 = vld [vmem:[#allocation5 + $0x280] sm:$0xff]
    %v178 = vld [vmem:[#allocation5 + $0x288] sm:$0xff]
    %v179 = vld [vmem:[#allocation5 + $0x290] sm:$0xff]
    %v180 = vld [vmem:[#allocation5 + $0x298] sm:$0xff]
    %v181 = vld [vmem:[#allocation5 + $0x2a0] sm:$0xff]
    %v182 = vld [vmem:[#allocation5 + $0x2a8] sm:$0xff]
    %v183 = vld [vmem:[#allocation5 + $0x2b0] sm:$0xff]
    %v184 = vld [vmem:[#allocation5 + $0x2b8] sm:$0xff]
    %v185 = vld [vmem:[#allocation5 + $0x2c0] sm:$0xff]
    %v186 = vld [vmem:[#allocation5 + $0x2c8] sm:$0xff]
    %v187 = vld [vmem:[#allocation5 + $0x2d0] sm:$0xff]
    %v188 = vld [vmem:[#allocation5 + $0x2d8] sm:$0xff]
    %v189 = vld [vmem:[#allocation5 + $0x2e0] sm:$0xff]
    %v190 = vld [vmem:[#allocation5 + $0x2e8] sm:$0xff]
    %v191 = vld [vmem:[#allocation5 + $0x2f0] sm:$0xff]
    %v192 = vld [vmem:[#allocation5 + $0x2f8] sm:$0xff]
    %v193 = vld [vmem:[#allocation5 + $0x300] sm:$0xff]
    %v194 = vld [vmem:[#allocation5 + $0x308] sm:$0xff]
    %v195 = vld [vmem:[#allocation5 + $0x310] sm:$0xff]
    %v196 = vld [vmem:[#allocation5 + $0x318] sm:$0xff]
    %v197 = vld [vmem:[#allocation5 + $0x320] sm:$0xff]
    %v198 = vld [vmem:[#allocation5 + $0x328] sm:$0xff]
    %v199 = vld [vmem:[#allocation5 + $0x330] sm:$0xff]
    %v200 = vld [vmem:[#allocation5 + $0x338] sm:$0xff]
    %v201 = vld [vmem:[#allocation5 + $0x340] sm:$0xff]
    %v202 = vld [vmem:[#allocation5 + $0x348] sm:$0xff]
    %v203 = vld [vmem:[#allocation5 + $0x350] sm:$0xff]
    %v204 = vld [vmem:[#allocation5 + $0x358] sm:$0xff]
    %v205 = vld [vmem:[#allocation5 + $0x360] sm:$0xff]
    %v206 = vld [vmem:[#allocation5 + $0x368] sm:$0xff]
    %v207 = vld [vmem:[#allocation5 + $0x370] sm:$0xff]
    %v208 = vld [vmem:[#allocation5 + $0x378] sm:$0xff]
    %v209 = vld [vmem:[#allocation5 + $0x380] sm:$0xff]
    %v210 = vld [vmem:[#allocation5 + $0x388] sm:$0xff]
    %v211 = vld [vmem:[#allocation5 + $0x390] sm:$0xff]
    %v212 = vld [vmem:[#allocation5 + $0x398] sm:$0xff]
    %v213 = vld [vmem:[#allocation5 + $0x3a0] sm:$0xff]
    %v214 = vld [vmem:[#allocation5 + $0x3a8] sm:$0xff]
    %v215 = vld [vmem:[#allocation5 + $0x3b0] sm:$0xff]
    %v216 = vld [vmem:[#allocation5 + $0x3b8] sm:$0xff]
    %v217 = vld [vmem:[#allocation5 + $0x3c0] sm:$0xff]
    %v218 = vld [vmem:[#allocation5 + $0x3c8] sm:$0xff]
    %v219 = vld [vmem:[#allocation5 + $0x3d0] sm:$0xff]
    %v220 = vld [vmem:[#allocation5 + $0x3d8] sm:$0xff]
    %v221 = vld [vmem:[#allocation5 + $0x3e0] sm:$0xff]
    %v222 = vld [vmem:[#allocation5 + $0x3e8] sm:$0xff]
    %v223 = vld [vmem:[#allocation5 + $0x3f0] sm:$0xff]
    %v224 = vld [vmem:[#allocation5 + $0x3f8] sm:$0xff]
    %v225 = vld [vmem:[%s2] sm:$0x3]
    %v227 = vlaneseq
    %v228 = vshrl.u32 %v227, 7
    %v229 = vsub.s32 0, %v228
    %v230 = vrot.slane %v225, %v229
    %v231 = vlaneseq
    %v232 = vshrl.u32 %v231, 7
    %v233 = vsub.s32 1, %v232
    %v234 = vrot.slane %v225, %v233
    %v365 = vunpack.c.l.b16 %v97
    %v366 = vunpack.c.h.b16 %v97
    %v367 = vunpack.c.l.b16 %v98
    %v368 = vunpack.c.h.b16 %v98
    %v369 = vunpack.c.l.b16 %v99
    %v370 = vunpack.c.h.b16 %v99
    %v371 = vunpack.c.l.b16 %v100
    %v372 = vunpack.c.h.b16 %v100
    %v373 = vunpack.c.l.b16 %v101
    %v374 = vunpack.c.h.b16 %v101
    %v375 = vunpack.c.l.b16 %v102
    %v376 = vunpack.c.h.b16 %v102
    %v377 = vunpack.c.l.b16 %v103
    %v378 = vunpack.c.h.b16 %v103
    %v379 = vunpack.c.l.b16 %v104
    %v380 = vunpack.c.h.b16 %v104
    %v381 = vunpack.c.l.b16 %v105
    %v382 = vunpack.c.h.b16 %v105
    %v383 = vunpack.c.l.b16 %v106
    %v384 = vunpack.c.h.b16 %v106
    %v385 = vunpack.c.l.b16 %v107
    %v386 = vunpack.c.h.b16 %v107
    %v387 = vunpack.c.l.b16 %v108
    %v388 = vunpack.c.h.b16 %v108
    %v389 = vunpack.c.l.b16 %v109
    %v390 = vunpack.c.h.b16 %v109
    %v391 = vunpack.c.l.b16 %v110
    %v392 = vunpack.c.h.b16 %v110
    %v393 = vunpack.c.l.b16 %v111
    %v394 = vunpack.c.h.b16 %v111
    %v395 = vunpack.c.l.b16 %v112
    %v396 = vunpack.c.h.b16 %v112
    %v397 = vunpack.c.l.b16 %v113
    %v398 = vunpack.c.h.b16 %v113
    %v399 = vunpack.c.l.b16 %v114
    %v400 = vunpack.c.h.b16 %v114
    %v401 = vunpack.c.l.b16 %v115
    %v402 = vunpack.c.h.b16 %v115
    %v403 = vunpack.c.l.b16 %v116
    %v404 = vunpack.c.h.b16 %v116
    %v405 = vunpack.c.l.b16 %v117
    %v406 = vunpack.c.h.b16 %v117
    %v407 = vunpack.c.l.b16 %v118
    %v408 = vunpack.c.h.b16 %v118
    %v409 = vunpack.c.l.b16 %v119
    %v410 = vunpack.c.h.b16 %v119
    %v411 = vunpack.c.l.b16 %v120
    %v412 = vunpack.c.h.b16 %v120
    %v413 = vunpack.c.l.b16 %v121
    %v414 = vunpack.c.h.b16 %v121
    %v415 = vunpack.c.l.b16 %v122
    %v416 = vunpack.c.h.b16 %v122
    %v417 = vunpack.c.l.b16 %v123
    %v418 = vunpack.c.h.b16 %v123
    %v419 = vunpack.c.l.b16 %v124
    %v420 = vunpack.c.h.b16 %v124
    %v421 = vunpack.c.l.b16 %v125
    %v422 = vunpack.c.h.b16 %v125
    %v423 = vunpack.c.l.b16 %v126
    %v424 = vunpack.c.h.b16 %v126
    %v425 = vunpack.c.l.b16 %v127
    %v426 = vunpack.c.h.b16 %v127
    %v427 = vunpack.c.l.b16 %v128
    %v428 = vunpack.c.h.b16 %v128
    %v429 = vunpack.c.l.b16 %v129
    %v430 = vunpack.c.h.b16 %v129
    %v431 = vunpack.c.l.b16 %v130
    %v432 = vunpack.c.h.b16 %v130
    %v433 = vunpack.c.l.b16 %v131
    %v434 = vunpack.c.h.b16 %v131
    %v435 = vunpack.c.l.b16 %v132
    %v436 = vunpack.c.h.b16 %v132
    %v437 = vunpack.c.l.b16 %v133
    %v438 = vunpack.c.h.b16 %v133
    %v439 = vunpack.c.l.b16 %v134
    %v440 = vunpack.c.h.b16 %v134
    %v441 = vunpack.c.l.b16 %v135
    %v442 = vunpack.c.h.b16 %v135
    %v443 = vunpack.c.l.b16 %v136
    %v444 = vunpack.c.h.b16 %v136
    %v445 = vunpack.c.l.b16 %v137
    %v446 = vunpack.c.h.b16 %v137
    %v447 = vunpack.c.l.b16 %v138
    %v448 = vunpack.c.h.b16 %v138
    %v449 = vunpack.c.l.b16 %v139
    %v450 = vunpack.c.h.b16 %v139
    %v451 = vunpack.c.l.b16 %v140
    %v452 = vunpack.c.h.b16 %v140
    %v453 = vunpack.c.l.b16 %v141
    %v454 = vunpack.c.h.b16 %v141
    %v455 = vunpack.c.l.b16 %v142
    %v456 = vunpack.c.h.b16 %v142
    %v457 = vunpack.c.l.b16 %v143
    %v458 = vunpack.c.h.b16 %v143
    %v459 = vunpack.c.l.b16 %v144
    %v460 = vunpack.c.h.b16 %v144
    %v461 = vunpack.c.l.b16 %v145
    %v462 = vunpack.c.h.b16 %v145
    %v463 = vunpack.c.l.b16 %v146
    %v464 = vunpack.c.h.b16 %v146
    %v465 = vunpack.c.l.b16 %v147
    %v466 = vunpack.c.h.b16 %v147
    %v467 = vunpack.c.l.b16 %v148
    %v468 = vunpack.c.h.b16 %v148
    %v469 = vunpack.c.l.b16 %v149
    %v470 = vunpack.c.h.b16 %v149
    %v471 = vunpack.c.l.b16 %v150
    %v472 = vunpack.c.h.b16 %v150
    %v473 = vunpack.c.l.b16 %v151
    %v474 = vunpack.c.h.b16 %v151
    %v475 = vunpack.c.l.b16 %v152
    %v476 = vunpack.c.h.b16 %v152
    %v477 = vunpack.c.l.b16 %v153
    %v478 = vunpack.c.h.b16 %v153
    %v479 = vunpack.c.l.b16 %v154
    %v480 = vunpack.c.h.b16 %v154
    %v481 = vunpack.c.l.b16 %v155
    %v482 = vunpack.c.h.b16 %v155
    %v483 = vunpack.c.l.b16 %v156
    %v484 = vunpack.c.h.b16 %v156
    %v485 = vunpack.c.l.b16 %v157
    %v486 = vunpack.c.h.b16 %v157
    %v487 = vunpack.c.l.b16 %v158
    %v488 = vunpack.c.h.b16 %v158
    %v489 = vunpack.c.l.b16 %v159
    %v490 = vunpack.c.h.b16 %v159
    %v491 = vunpack.c.l.b16 %v160
    %v492 = vunpack.c.h.b16 %v160
    %v493 = vunpack.c.l.b16 %v161
    %v494 = vunpack.c.h.b16 %v161
    %v495 = vunpack.c.l.b16 %v162
    %v496 = vunpack.c.h.b16 %v162
    %v497 = vunpack.c.l.b16 %v163
    %v498 = vunpack.c.h.b16 %v163
    %v499 = vunpack.c.l.b16 %v164
    %v500 = vunpack.c.h.b16 %v164
    %v501 = vunpack.c.l.b16 %v165
    %v502 = vunpack.c.h.b16 %v165
    %v503 = vunpack.c.l.b16 %v166
    %v504 = vunpack.c.h.b16 %v166
    %v505 = vunpack.c.l.b16 %v167
    %v506 = vunpack.c.h.b16 %v167
    %v507 = vunpack.c.l.b16 %v168
    %v508 = vunpack.c.h.b16 %v168
    %v509 = vunpack.c.l.b16 %v169
    %v510 = vunpack.c.h.b16 %v169
    %v511 = vunpack.c.l.b16 %v170
    %v512 = vunpack.c.h.b16 %v170
    %v513 = vunpack.c.l.b16 %v171
    %v514 = vunpack.c.h.b16 %v171
    %v515 = vunpack.c.l.b16 %v172
    %v516 = vunpack.c.h.b16 %v172
    %v517 = vunpack.c.l.b16 %v173
    %v518 = vunpack.c.h.b16 %v173
    %v519 = vunpack.c.l.b16 %v174
    %v520 = vunpack.c.h.b16 %v174
    %v521 = vunpack.c.l.b16 %v175
    %v522 = vunpack.c.h.b16 %v175
    %v523 = vunpack.c.l.b16 %v176
    %v524 = vunpack.c.h.b16 %v176
    %v525 = vunpack.c.l.b16 %v177
    %v526 = vunpack.c.h.b16 %v177
    %v527 = vunpack.c.l.b16 %v178
    %v528 = vunpack.c.h.b16 %v178
    %v529 = vunpack.c.l.b16 %v179
    %v530 = vunpack.c.h.b16 %v179
    %v531 = vunpack.c.l.b16 %v180
    %v532 = vunpack.c.h.b16 %v180
    %v533 = vunpack.c.l.b16 %v181
    %v534 = vunpack.c.h.b16 %v181
    %v535 = vunpack.c.l.b16 %v182
    %v536 = vunpack.c.h.b16 %v182
    %v537 = vunpack.c.l.b16 %v183
    %v538 = vunpack.c.h.b16 %v183
    %v539 = vunpack.c.l.b16 %v184
    %v540 = vunpack.c.h.b16 %v184
    %v541 = vunpack.c.l.b16 %v185
    %v542 = vunpack.c.h.b16 %v185
    %v543 = vunpack.c.l.b16 %v186
    %v544 = vunpack.c.h.b16 %v186
    %v545 = vunpack.c.l.b16 %v187
    %v546 = vunpack.c.h.b16 %v187
    %v547 = vunpack.c.l.b16 %v188
    %v548 = vunpack.c.h.b16 %v188
    %v549 = vunpack.c.l.b16 %v189
    %v550 = vunpack.c.h.b16 %v189
    %v551 = vunpack.c.l.b16 %v190
    %v552 = vunpack.c.h.b16 %v190
    %v553 = vunpack.c.l.b16 %v191
    %v554 = vunpack.c.h.b16 %v191
    %v555 = vunpack.c.l.b16 %v192
    %v556 = vunpack.c.h.b16 %v192
    %v557 = vunpack.c.l.b16 %v193
    %v558 = vunpack.c.h.b16 %v193
    %v559 = vunpack.c.l.b16 %v194
    %v560 = vunpack.c.h.b16 %v194
    %v561 = vunpack.c.l.b16 %v195
    %v562 = vunpack.c.h.b16 %v195
    %v563 = vunpack.c.l.b16 %v196
    %v564 = vunpack.c.h.b16 %v196
    %v565 = vunpack.c.l.b16 %v197
    %v566 = vunpack.c.h.b16 %v197
    %v567 = vunpack.c.l.b16 %v198
    %v568 = vunpack.c.h.b16 %v198
    %v569 = vunpack.c.l.b16 %v199
    %v570 = vunpack.c.h.b16 %v199
    %v571 = vunpack.c.l.b16 %v200
    %v572 = vunpack.c.h.b16 %v200
    %v573 = vunpack.c.l.b16 %v201
    %v574 = vunpack.c.h.b16 %v201
    %v575 = vunpack.c.l.b16 %v202
    %v576 = vunpack.c.h.b16 %v202
    %v577 = vunpack.c.l.b16 %v203
    %v578 = vunpack.c.h.b16 %v203
    %v579 = vunpack.c.l.b16 %v204
    %v580 = vunpack.c.h.b16 %v204
    %v581 = vunpack.c.l.b16 %v205
    %v582 = vunpack.c.h.b16 %v205
    %v583 = vunpack.c.l.b16 %v206
    %v584 = vunpack.c.h.b16 %v206
    %v585 = vunpack.c.l.b16 %v207
    %v586 = vunpack.c.h.b16 %v207
    %v587 = vunpack.c.l.b16 %v208
    %v588 = vunpack.c.h.b16 %v208
    %v589 = vunpack.c.l.b16 %v209
    %v590 = vunpack.c.h.b16 %v209
    %v591 = vunpack.c.l.b16 %v210
    %v592 = vunpack.c.h.b16 %v210
    %v593 = vunpack.c.l.b16 %v211
    %v594 = vunpack.c.h.b16 %v211
    %v595 = vunpack.c.l.b16 %v212
    %v596 = vunpack.c.h.b16 %v212
    %v597 = vunpack.c.l.b16 %v213
    %v598 = vunpack.c.h.b16 %v213
    %v599 = vunpack.c.l.b16 %v214
    %v600 = vunpack.c.h.b16 %v214
    %v601 = vunpack.c.l.b16 %v215
    %v602 = vunpack.c.h.b16 %v215
    %v603 = vunpack.c.l.b16 %v216
    %v604 = vunpack.c.h.b16 %v216
    %v605 = vunpack.c.l.b16 %v217
    %v606 = vunpack.c.h.b16 %v217
    %v607 = vunpack.c.l.b16 %v218
    %v608 = vunpack.c.h.b16 %v218
    %v609 = vunpack.c.l.b16 %v219
    %v610 = vunpack.c.h.b16 %v219
    %v611 = vunpack.c.l.b16 %v220
    %v612 = vunpack.c.h.b16 %v220
    %v613 = vunpack.c.l.b16 %v221
    %v614 = vunpack.c.h.b16 %v221
    %v615 = vunpack.c.l.b16 %v222
    %v616 = vunpack.c.h.b16 %v222
    %v617 = vunpack.c.l.b16 %v223
    %v618 = vunpack.c.h.b16 %v223
    %v619 = vunpack.c.l.b16 %v224
    %v620 = vunpack.c.h.b16 %v224
    %v621 = vpack.c.b16 %v367, %v365
    %v622 = vpack.c.b16 %v368, %v366
    %v623 = vpack.c.b16 %v371, %v369
    %v624 = vpack.c.b16 %v372, %v370
    %v625 = vpack.c.b16 %v375, %v373
    %v626 = vpack.c.b16 %v376, %v374
    %v627 = vpack.c.b16 %v379, %v377
    %v628 = vpack.c.b16 %v380, %v378
    %v629 = vpack.c.b16 %v383, %v381
    %v630 = vpack.c.b16 %v384, %v382
    %v631 = vpack.c.b16 %v387, %v385
    %v632 = vpack.c.b16 %v388, %v386
    %v633 = vpack.c.b16 %v391, %v389
    %v634 = vpack.c.b16 %v392, %v390
    %v635 = vpack.c.b16 %v395, %v393
    %v636 = vpack.c.b16 %v396, %v394
    %v637 = vpack.c.b16 %v399, %v397
    %v638 = vpack.c.b16 %v400, %v398
    %v639 = vpack.c.b16 %v403, %v401
    %v640 = vpack.c.b16 %v404, %v402
    %v641 = vpack.c.b16 %v407, %v405
    %v642 = vpack.c.b16 %v408, %v406
    %v643 = vpack.c.b16 %v411, %v409
    %v644 = vpack.c.b16 %v412, %v410
    %v645 = vpack.c.b16 %v415, %v413
    %v646 = vpack.c.b16 %v416, %v414
    %v647 = vpack.c.b16 %v419, %v417
    %v648 = vpack.c.b16 %v420, %v418
    %v649 = vpack.c.b16 %v423, %v421
    %v650 = vpack.c.b16 %v424, %v422
    %v651 = vpack.c.b16 %v427, %v425
    %v652 = vpack.c.b16 %v428, %v426
    %v653 = vpack.c.b16 %v431, %v429
    %v654 = vpack.c.b16 %v432, %v430
    %v655 = vpack.c.b16 %v435, %v433
    %v656 = vpack.c.b16 %v436, %v434
    %v657 = vpack.c.b16 %v439, %v437
    %v658 = vpack.c.b16 %v440, %v438
    %v659 = vpack.c.b16 %v443, %v441
    %v660 = vpack.c.b16 %v444, %v442
    %v661 = vpack.c.b16 %v447, %v445
    %v662 = vpack.c.b16 %v448, %v446
    %v663 = vpack.c.b16 %v451, %v449
    %v664 = vpack.c.b16 %v452, %v450
    %v665 = vpack.c.b16 %v455, %v453
    %v666 = vpack.c.b16 %v456, %v454
    %v667 = vpack.c.b16 %v459, %v457
    %v668 = vpack.c.b16 %v460, %v458
    %v669 = vpack.c.b16 %v463, %v461
    %v670 = vpack.c.b16 %v464, %v462
    %v671 = vpack.c.b16 %v467, %v465
    %v672 = vpack.c.b16 %v468, %v466
    %v673 = vpack.c.b16 %v471, %v469
    %v674 = vpack.c.b16 %v472, %v470
    %v675 = vpack.c.b16 %v475, %v473
    %v676 = vpack.c.b16 %v476, %v474
    %v677 = vpack.c.b16 %v479, %v477
    %v678 = vpack.c.b16 %v480, %v478
    %v679 = vpack.c.b16 %v483, %v481
    %v680 = vpack.c.b16 %v484, %v482
    %v681 = vpack.c.b16 %v487, %v485
    %v682 = vpack.c.b16 %v488, %v486
    %v683 = vpack.c.b16 %v491, %v489
    %v684 = vpack.c.b16 %v492, %v490
    %v685 = vpack.c.b16 %v495, %v493
    %v686 = vpack.c.b16 %v496, %v494
    %v687 = vpack.c.b16 %v499, %v497
    %v688 = vpack.c.b16 %v500, %v498
    %v689 = vpack.c.b16 %v503, %v501
    %v690 = vpack.c.b16 %v504, %v502
    %v691 = vpack.c.b16 %v507, %v505
    %v692 = vpack.c.b16 %v508, %v506
    %v693 = vpack.c.b16 %v511, %v509
    %v694 = vpack.c.b16 %v512, %v510
    %v695 = vpack.c.b16 %v515, %v513
    %v696 = vpack.c.b16 %v516, %v514
    %v697 = vpack.c.b16 %v519, %v517
    %v698 = vpack.c.b16 %v520, %v518
    %v699 = vpack.c.b16 %v523, %v521
    %v700 = vpack.c.b16 %v524, %v522
    %v701 = vpack.c.b16 %v527, %v525
    %v702 = vpack.c.b16 %v528, %v526
    %v703 = vpack.c.b16 %v531, %v529
    %v704 = vpack.c.b16 %v532, %v530
    %v705 = vpack.c.b16 %v535, %v533
    %v706 = vpack.c.b16 %v536, %v534
    %v707 = vpack.c.b16 %v539, %v537
    %v708 = vpack.c.b16 %v540, %v538
    %v709 = vpack.c.b16 %v543, %v541
    %v710 = vpack.c.b16 %v544, %v542
    %v711 = vpack.c.b16 %v547, %v545
    %v712 = vpack.c.b16 %v548, %v546
    %v713 = vpack.c.b16 %v551, %v549
    %v714 = vpack.c.b16 %v552, %v550
    %v715 = vpack.c.b16 %v555, %v553
    %v716 = vpack.c.b16 %v556, %v554
    %v717 = vpack.c.b16 %v559, %v557
    %v718 = vpack.c.b16 %v560, %v558
    %v719 = vpack.c.b16 %v563, %v561
    %v720 = vpack.c.b16 %v564, %v562
    %v721 = vpack.c.b16 %v567, %v565
    %v722 = vpack.c.b16 %v568, %v566
    %v723 = vpack.c.b16 %v571, %v569
    %v724 = vpack.c.b16 %v572, %v570
    %v725 = vpack.c.b16 %v575, %v573
    %v726 = vpack.c.b16 %v576, %v574
    %v727 = vpack.c.b16 %v579, %v577
    %v728 = vpack.c.b16 %v580, %v578
    %v729 = vpack.c.b16 %v583, %v581
    %v730 = vpack.c.b16 %v584, %v582
    %v731 = vpack.c.b16 %v587, %v585
    %v732 = vpack.c.b16 %v588, %v586
    %v733 = vpack.c.b16 %v591, %v589
    %v734 = vpack.c.b16 %v592, %v590
    %v735 = vpack.c.b16 %v595, %v593
    %v736 = vpack.c.b16 %v596, %v594
    %v737 = vpack.c.b16 %v599, %v597
    %v738 = vpack.c.b16 %v600, %v598
    %v739 = vpack.c.b16 %v603, %v601
    %v740 = vpack.c.b16 %v604, %v602
    %v741 = vpack.c.b16 %v607, %v605
    %v742 = vpack.c.b16 %v608, %v606
    %v743 = vpack.c.b16 %v611, %v609
    %v744 = vpack.c.b16 %v612, %v610
    %v745 = vpack.c.b16 %v615, %v613
    %v746 = vpack.c.b16 %v616, %v614
    %v747 = vpack.c.b16 %v619, %v617
    %v748 = vpack.c.b16 %v620, %v618
    %877 = vmatprep.subr.bf16.mxu0 %v622
    %878 = vmatpush1.bf16.msra.mxu0 %v621
    %879 = vmatprep.subr.bf16.mxu0 %v624
    %880 = vmatpush1.bf16.msra.mxu0 %v623
    %881 = vmatprep.subr.bf16.mxu0 %v626
    %882 = vmatpush1.bf16.msra.mxu0 %v625
    %883 = vmatprep.subr.bf16.mxu0 %v628
    %884 = vmatpush1.bf16.msra.mxu0 %v627
    %885 = vmatprep.subr.bf16.mxu0 %v630
    %886 = vmatpush1.bf16.msra.mxu0 %v629
    %887 = vmatprep.subr.bf16.mxu0 %v632
    %888 = vmatpush1.bf16.msra.mxu0 %v631
    %889 = vmatprep.subr.bf16.mxu0 %v634
    %890 = vmatpush1.bf16.msra.mxu0 %v633
    %891 = vmatprep.subr.bf16.mxu0 %v636
    %892 = vmatpush1.bf16.msra.mxu0 %v635
    %893 = vmatprep.subr.bf16.mxu0 %v638
    %894 = vmatpush1.bf16.msra.mxu0 %v637
    %895 = vmatprep.subr.bf16.mxu0 %v640
    %896 = vmatpush1.bf16.msra.mxu0 %v639
    %897 = vmatprep.subr.bf16.mxu0 %v642
    %898 = vmatpush1.bf16.msra.mxu0 %v641
    %899 = vmatprep.subr.bf16.mxu0 %v644
    %900 = vmatpush1.bf16.msra.mxu0 %v643
    %901 = vmatprep.subr.bf16.mxu0 %v646
    %902 = vmatpush1.bf16.msra.mxu0 %v645
    %903 = vmatprep.subr.bf16.mxu0 %v648
    %904 = vmatpush1.bf16.msra.mxu0 %v647
    %905 = vmatprep.subr.bf16.mxu0 %v650
    %906 = vmatpush1.bf16.msra.mxu0 %v649
    %907 = vmatprep.subr.bf16.mxu0 %v652
    %908 = vmatpush1.bf16.msra.mxu0 %v651
    %909 = vmatprep.mubr.bf16.mxu0 %v90
    %910 = vmatmul.mubr.bf16.gmra.mrb[0].mxu0 %v89
    %v911 = vpop.f32.mrb[0].mxu0
    %v912 = vadd.f32 %v230, %v911
    %v913 = vpop.f32.mrb[0].mxu0
    %v914 = vadd.f32 %v234, %v913
    %v915 = vpop.f32.mrb[0].mxu0
    %v916 = vpop.f32.mrb[0].mxu0
    %917 = vdwg.mxu0
    %918 = vmatprep.subr.bf16.mxu0 %v654
    %919 = vmatpush1.bf16.msra.mxu0 %v653
    %920 = vmatprep.subr.bf16.mxu0 %v656
    %921 = vmatpush1.bf16.msra.mxu0 %v655
    %922 = vmatprep.subr.bf16.mxu0 %v658
    %923 = vmatpush1.bf16.msra.mxu0 %v657
    %924 = vmatprep.subr.bf16.mxu0 %v660
    %925 = vmatpush1.bf16.msra.mxu0 %v659
    %926 = vmatprep.subr.bf16.mxu0 %v662
    %927 = vmatpush1.bf16.msra.mxu0 %v661
    %928 = vmatprep.subr.bf16.mxu0 %v664
    %929 = vmatpush1.bf16.msra.mxu0 %v663
    %930 = vmatprep.subr.bf16.mxu0 %v666
    %931 = vmatpush1.bf16.msra.mxu0 %v665
    %932 = vmatprep.subr.bf16.mxu0 %v668
    %933 = vmatpush1.bf16.msra.mxu0 %v667
    %934 = vmatprep.subr.bf16.mxu0 %v670
    %935 = vmatpush1.bf16.msra.mxu0 %v669
    %936 = vmatprep.subr.bf16.mxu0 %v672
    %937 = vmatpush1.bf16.msra.mxu0 %v671
    %938 = vmatprep.subr.bf16.mxu0 %v674
    %939 = vmatpush1.bf16.msra.mxu0 %v673
    %940 = vmatprep.subr.bf16.mxu0 %v676
    %941 = vmatpush1.bf16.msra.mxu0 %v675
    %942 = vmatprep.subr.bf16.mxu0 %v678
    %943 = vmatpush1.bf16.msra.mxu0 %v677
    %944 = vmatprep.subr.bf16.mxu0 %v680
    %945 = vmatpush1.bf16.msra.mxu0 %v679
    %946 = vmatprep.subr.bf16.mxu0 %v682
    %947 = vmatpush1.bf16.msra.mxu0 %v681
    %948 = vmatprep.subr.bf16.mxu0 %v684
    %949 = vmatpush1.bf16.msra.mxu0 %v683
    %950 = vmatprep.mubr.bf16.mxu0 %v92
    %951 = vmatmul.mubr.bf16.gmra.mrb[0].mxu0 %v91
    %v952 = vpop.f32.mrb[0].mxu0
    %v953 = vadd.f32 %v912, %v952
    %v954 = vpop.f32.mrb[0].mxu0
    %v955 = vadd.f32 %v914, %v954
    %v956 = vpop.f32.mrb[0].mxu0
    %v957 = vpop.f32.mrb[0].mxu0
    %958 = vdwg.mxu0
    %959 = vmatprep.subr.bf16.mxu0 %v686
    %960 = vmatpush1.bf16.msra.mxu0 %v685
    %961 = vmatprep.subr.bf16.mxu0 %v688
    %962 = vmatpush1.bf16.msra.mxu0 %v687
    %963 = vmatprep.subr.bf16.mxu0 %v690
    %964 = vmatpush1.bf16.msra.mxu0 %v689
    %965 = vmatprep.subr.bf16.mxu0 %v692
    %966 = vmatpush1.bf16.msra.mxu0 %v691
    %967 = vmatprep.subr.bf16.mxu0 %v694
    %968 = vmatpush1.bf16.msra.mxu0 %v693
    %969 = vmatprep.subr.bf16.mxu0 %v696
    %970 = vmatpush1.bf16.msra.mxu0 %v695
    %971 = vmatprep.subr.bf16.mxu0 %v698
    %972 = vmatpush1.bf16.msra.mxu0 %v697
    %973 = vmatprep.subr.bf16.mxu0 %v700
    %974 = vmatpush1.bf16.msra.mxu0 %v699
    %975 = vmatprep.subr.bf16.mxu0 %v702
    %976 = vmatpush1.bf16.msra.mxu0 %v701
    %977 = vmatprep.subr.bf16.mxu0 %v704
    %978 = vmatpush1.bf16.msra.mxu0 %v703
    %979 = vmatprep.subr.bf16.mxu0 %v706
    %980 = vmatpush1.bf16.msra.mxu0 %v705
    %981 = vmatprep.subr.bf16.mxu0 %v708
    %982 = vmatpush1.bf16.msra.mxu0 %v707
    %983 = vmatprep.subr.bf16.mxu0 %v710
    %984 = vmatpush1.bf16.msra.mxu0 %v709
    %985 = vmatprep.subr.bf16.mxu0 %v712
    %986 = vmatpush1.bf16.msra.mxu0 %v711
    %987 = vmatprep.subr.bf16.mxu0 %v714
    %988 = vmatpush1.bf16.msra.mxu0 %v713
    %989 = vmatprep.subr.bf16.mxu0 %v716
    %990 = vmatpush1.bf16.msra.mxu0 %v715
    %991 = vmatprep.mubr.bf16.mxu0 %v94
    %992 = vmatmul.mubr.bf16.gmra.mrb[0].mxu0 %v93
    %v993 = vpop.f32.mrb[0].mxu0
    %v994 = vadd.f32 %v953, %v993
    %v995 = vpop.f32.mrb[0].mxu0
    %v996 = vadd.f32 %v955, %v995
    %v997 = vpop.f32.mrb[0].mxu0
    %v998 = vpop.f32.mrb[0].mxu0
    %999 = vdwg.mxu0
    %1000 = vmatprep.subr.bf16.mxu0 %v718
    %1001 = vmatpush1.bf16.msra.mxu0 %v717
    %1002 = vmatprep.subr.bf16.mxu0 %v720
    %1003 = vmatpush1.bf16.msra.mxu0 %v719
    %1004 = vmatprep.subr.bf16.mxu0 %v722
    %1005 = vmatpush1.bf16.msra.mxu0 %v721
    %1006 = vmatprep.subr.bf16.mxu0 %v724
    %1007 = vmatpush1.bf16.msra.mxu0 %v723
    %1008 = vmatprep.subr.bf16.mxu0 %v726
    %1009 = vmatpush1.bf16.msra.mxu0 %v725
    %1010 = vmatprep.subr.bf16.mxu0 %v728
    %1011 = vmatpush1.bf16.msra.mxu0 %v727
    %1012 = vmatprep.subr.bf16.mxu0 %v730
    %1013 = vmatpush1.bf16.msra.mxu0 %v729
    %1014 = vmatprep.subr.bf16.mxu0 %v732
    %1015 = vmatpush1.bf16.msra.mxu0 %v731
    %1016 = vmatprep.subr.bf16.mxu0 %v734
    %1017 = vmatpush1.bf16.msra.mxu0 %v733
    %1018 = vmatprep.subr.bf16.mxu0 %v736
    %1019 = vmatpush1.bf16.msra.mxu0 %v735
    %1020 = vmatprep.subr.bf16.mxu0 %v738
    %1021 = vmatpush1.bf16.msra.mxu0 %v737
    %1022 = vmatprep.subr.bf16.mxu0 %v740
    %1023 = vmatpush1.bf16.msra.mxu0 %v739
    %1024 = vmatprep.subr.bf16.mxu0 %v742
    %1025 = vmatpush1.bf16.msra.mxu0 %v741
    %1026 = vmatprep.subr.bf16.mxu0 %v744
    %1027 = vmatpush1.bf16.msra.mxu0 %v743
    %1028 = vmatprep.subr.bf16.mxu0 %v746
    %1029 = vmatpush1.bf16.msra.mxu0 %v745
    %1030 = vmatprep.subr.bf16.mxu0 %v748
    %1031 = vmatpush1.bf16.msra.mxu0 %v747
    %1032 = vmatprep.mubr.bf16.mxu0 %v96
    %1033 = vmatmul.mubr.bf16.gmra.mrb[0].mxu0 %v95
    %v1034 = vpop.f32.mrb[0].mxu0
    %v1035 = vadd.f32 %v994, %v1034
    %v1036 = vpop.f32.mrb[0].mxu0
    %v1037 = vadd.f32 %v996, %v1036
    %v1038 = vpop.f32.mrb[0].mxu0
    %v1039 = vpop.f32.mrb[0].mxu0
    %1040 = vdwg.mxu0
    %v1041 = vmax.f32 %v1035, 0.0
    %v1042 = vmax.f32 %v1037, 0.0
    %v1043 = vpack.c.bf16 %v1041, %v1041
    %v1044 = vpack.c.bf16 %v1042, %v1042
    %v1045 = vld [vmem:[#allocation7] sm:$0xf]
    %v1046 = vld [vmem:[#allocation7 + $0x4] sm:$0xf]
    %v1047 = vld [vmem:[#allocation7 + $0x8] sm:$0xf]
    %v1048 = vld [vmem:[#allocation7 + $0xc] sm:$0xf]
    %v1049 = vld [vmem:[#allocation7 + $0x10] sm:$0xf]
    %v1050 = vld [vmem:[#allocation7 + $0x14] sm:$0xf]
    %v1051 = vld [vmem:[#allocation7 + $0x18] sm:$0xf]
    %v1052 = vld [vmem:[#allocation7 + $0x1c] sm:$0xf]
    %v1053 = vld [vmem:[#allocation7 + $0x20] sm:$0xf]
    %v1054 = vld [vmem:[#allocation7 + $0x24] sm:$0xf]
    %v1055 = vld [vmem:[#allocation7 + $0x28] sm:$0xf]
    %v1056 = vld [vmem:[#allocation7 + $0x2c] sm:$0xf]
    %v1057 = vld [vmem:[#allocation7 + $0x30] sm:$0xf]
    %v1058 = vld [vmem:[#allocation7 + $0x34] sm:$0xf]
    %v1059 = vld [vmem:[#allocation7 + $0x38] sm:$0xf]
    %v1060 = vld [vmem:[#allocation7 + $0x3c] sm:$0xf]
    %v1061 = vld [vmem:[#allocation7 + $0x40] sm:$0xf]
    %v1062 = vld [vmem:[#allocation7 + $0x44] sm:$0xf]
    %v1063 = vld [vmem:[#allocation7 + $0x48] sm:$0xf]
    %v1064 = vld [vmem:[#allocation7 + $0x4c] sm:$0xf]
    %v1065 = vld [vmem:[#allocation7 + $0x50] sm:$0xf]
    %v1066 = vld [vmem:[#allocation7 + $0x54] sm:$0xf]
    %v1067 = vld [vmem:[#allocation7 + $0x58] sm:$0xf]
    %v1068 = vld [vmem:[#allocation7 + $0x5c] sm:$0xf]
    %v1069 = vld [vmem:[#allocation7 + $0x60] sm:$0xf]
    %v1070 = vld [vmem:[#allocation7 + $0x64] sm:$0xf]
    %v1071 = vld [vmem:[#allocation7 + $0x68] sm:$0xf]
    %v1072 = vld [vmem:[#allocation7 + $0x6c] sm:$0xf]
    %v1073 = vld [vmem:[#allocation7 + $0x70] sm:$0xf]
    %v1074 = vld [vmem:[#allocation7 + $0x74] sm:$0xf]
    %v1075 = vld [vmem:[#allocation7 + $0x78] sm:$0xf]
    %v1076 = vld [vmem:[#allocation7 + $0x7c] sm:$0xf]
    %v1077 = vld [vmem:[%s4] sm:$0x1]
    %v1079 = vlaneseq
    %v1080 = vshrl.u32 %v1079, 7
    %v1081 = vsub.s32 0, %v1080
    %v1082 = vrot.slane %v1077, %v1081
    %v1116 = vunpack.c.l.b16 %v1045
    %v1117 = vunpack.c.l.b16 %v1046
    %v1118 = vunpack.c.l.b16 %v1047
    %v1119 = vunpack.c.l.b16 %v1048
    %v1120 = vunpack.c.l.b16 %v1049
    %v1121 = vunpack.c.l.b16 %v1050
    %v1122 = vunpack.c.l.b16 %v1051
    %v1123 = vunpack.c.l.b16 %v1052
    %v1124 = vunpack.c.l.b16 %v1053
    %v1125 = vunpack.c.l.b16 %v1054
    %v1126 = vunpack.c.l.b16 %v1055
    %v1127 = vunpack.c.l.b16 %v1056
    %v1128 = vunpack.c.l.b16 %v1057
    %v1129 = vunpack.c.l.b16 %v1058
    %v1130 = vunpack.c.l.b16 %v1059
    %v1131 = vunpack.c.l.b16 %v1060
    %v1132 = vunpack.c.l.b16 %v1061
    %v1133 = vunpack.c.l.b16 %v1062
    %v1134 = vunpack.c.l.b16 %v1063
    %v1135 = vunpack.c.l.b16 %v1064
    %v1136 = vunpack.c.l.b16 %v1065
    %v1137 = vunpack.c.l.b16 %v1066
    %v1138 = vunpack.c.l.b16 %v1067
    %v1139 = vunpack.c.l.b16 %v1068
    %v1140 = vunpack.c.l.b16 %v1069
    %v1141 = vunpack.c.l.b16 %v1070
    %v1142 = vunpack.c.l.b16 %v1071
    %v1143 = vunpack.c.l.b16 %v1072
    %v1144 = vunpack.c.l.b16 %v1073
    %v1145 = vunpack.c.l.b16 %v1074
    %v1146 = vunpack.c.l.b16 %v1075
    %v1147 = vunpack.c.l.b16 %v1076
    %v1148 = vpack.c.b16 %v1117, %v1116
    %v1149 = vpack.c.b16 %v1119, %v1118
    %v1150 = vpack.c.b16 %v1121, %v1120
    %v1151 = vpack.c.b16 %v1123, %v1122
    %v1152 = vpack.c.b16 %v1125, %v1124
    %v1153 = vpack.c.b16 %v1127, %v1126
    %v1154 = vpack.c.b16 %v1129, %v1128
    %v1155 = vpack.c.b16 %v1131, %v1130
    %v1156 = vpack.c.b16 %v1133, %v1132
    %v1157 = vpack.c.b16 %v1135, %v1134
    %v1158 = vpack.c.b16 %v1137, %v1136
    %v1159 = vpack.c.b16 %v1139, %v1138
    %v1160 = vpack.c.b16 %v1141, %v1140
    %v1161 = vpack.c.b16 %v1143, %v1142
    %v1162 = vpack.c.b16 %v1145, %v1144
    %v1163 = vpack.c.b16 %v1147, %v1146
    %1180 = vmatprep.subr.bf16.mxu0 0
    %1181 = vmatpush1.bf16.msra.mxu0 %v1148
    %1182 = vmatprep.subr.bf16.mxu0 0
    %1183 = vmatpush1.bf16.msra.mxu0 %v1149
    %1184 = vmatprep.subr.bf16.mxu0 0
    %1185 = vmatpush1.bf16.msra.mxu0 %v1150
    %1186 = vmatprep.subr.bf16.mxu0 0
    %1187 = vmatpush1.bf16.msra.mxu0 %v1151
    %1188 = vmatprep.subr.bf16.mxu0 0
    %1189 = vmatpush1.bf16.msra.mxu0 %v1152
    %1190 = vmatprep.subr.bf16.mxu0 0
    %1191 = vmatpush1.bf16.msra.mxu0 %v1153
    %1192 = vmatprep.subr.bf16.mxu0 0
    %1193 = vmatpush1.bf16.msra.mxu0 %v1154
    %1194 = vmatprep.subr.bf16.mxu0 0
    %1195 = vmatpush1.bf16.msra.mxu0 %v1155
    %1196 = vmatprep.subr.bf16.mxu0 0
    %1197 = vmatpush1.bf16.msra.mxu0 %v1156
    %1198 = vmatprep.subr.bf16.mxu0 0
    %1199 = vmatpush1.bf16.msra.mxu0 %v1157
    %1200 = vmatprep.subr.bf16.mxu0 0
    %1201 = vmatpush1.bf16.msra.mxu0 %v1158
    %1202 = vmatprep.subr.bf16.mxu0 0
    %1203 = vmatpush1.bf16.msra.mxu0 %v1159
    %1204 = vmatprep.subr.bf16.mxu0 0
    %1205 = vmatpush1.bf16.msra.mxu0 %v1160
    %1206 = vmatprep.subr.bf16.mxu0 0
    %1207 = vmatpush1.bf16.msra.mxu0 %v1161
    %1208 = vmatprep.subr.bf16.mxu0 0
    %1209 = vmatpush1.bf16.msra.mxu0 %v1162
    %1210 = vmatprep.subr.bf16.mxu0 0
    %1211 = vmatpush1.bf16.msra.mxu0 %v1163
    %1212 = vmatprep.mubr.bf16.mxu0 %v1044
    %1213 = vmatmul.mubr.bf16.gmra.mrb[0].mxu0 %v1043
    %v1214 = vpop.f32.mrb[0].mxu0
    %v1215 = vadd.f32 %v1082, %v1214
    %v1216 = vpop.f32.mrb[0].mxu0
    %v1217 = vpop.f32.mrb[0].mxu0
    %v1218 = vpop.f32.mrb[0].mxu0
    %1219 = vdwg.mxu0
    %v1220 = vmax.f32 %v1215, 0.0
    %v1221 = vpack.c.bf16 %v1220, %v1220
    %v1222 = vld [vmem:[#allocation8] sm:$0xf]
    %v1223 = vld [vmem:[#allocation8 + $0x4] sm:$0xf]
    %v1224 = vld [vmem:[#allocation8 + $0x8] sm:$0xf]
    %v1225 = vld [vmem:[#allocation8 + $0xc] sm:$0xf]
    %v1226 = vld [vmem:[#allocation8 + $0x10] sm:$0xf]
    %v1227 = vld [vmem:[#allocation8 + $0x14] sm:$0xf]
    %v1228 = vld [vmem:[#allocation8 + $0x18] sm:$0xf]
    %v1229 = vld [vmem:[#allocation8 + $0x1c] sm:$0xf]
    %v1230 = vld [vmem:[#allocation8 + $0x20] sm:$0xf]
    %v1231 = vld [vmem:[#allocation8 + $0x24] sm:$0xf]
    %v1232 = vld [vmem:[#allocation8 + $0x28] sm:$0xf]
    %v1233 = vld [vmem:[#allocation8 + $0x2c] sm:$0xf]
    %v1234 = vld [vmem:[#allocation8 + $0x30] sm:$0xf]
    %v1235 = vld [vmem:[#allocation8 + $0x34] sm:$0xf]
    %v1236 = vld [vmem:[#allocation8 + $0x38] sm:$0xf]
    %v1237 = vld [vmem:[#allocation8 + $0x3c] sm:$0xf]
    %v1238 = vld [vmem:[%s6] sm:$0x1]
    %v1240 = vlaneseq
    %v1241 = vshrl.u32 %v1240, 7
    %v1242 = vsub.s32 0, %v1241
    %v1243 = vrot.slane %v1238, %v1242
    %v1261 = vunpack.c.l.b16 %v1222
    %v1262 = vunpack.c.l.b16 %v1223
    %v1263 = vunpack.c.l.b16 %v1224
    %v1264 = vunpack.c.l.b16 %v1225
    %v1265 = vunpack.c.l.b16 %v1226
    %v1266 = vunpack.c.l.b16 %v1227
    %v1267 = vunpack.c.l.b16 %v1228
    %v1268 = vunpack.c.l.b16 %v1229
    %v1269 = vunpack.c.l.b16 %v1230
    %v1270 = vunpack.c.l.b16 %v1231
    %v1271 = vunpack.c.l.b16 %v1232
    %v1272 = vunpack.c.l.b16 %v1233
    %v1273 = vunpack.c.l.b16 %v1234
    %v1274 = vunpack.c.l.b16 %v1235
    %v1275 = vunpack.c.l.b16 %v1236
    %v1276 = vunpack.c.l.b16 %v1237
    %v1277 = vpack.c.b16 %v1262, %v1261
    %v1278 = vpack.c.b16 %v1264, %v1263
    %v1279 = vpack.c.b16 %v1266, %v1265
    %v1280 = vpack.c.b16 %v1268, %v1267
    %v1281 = vpack.c.b16 %v1270, %v1269
    %v1282 = vpack.c.b16 %v1272, %v1271
    %v1283 = vpack.c.b16 %v1274, %v1273
    %v1284 = vpack.c.b16 %v1276, %v1275
    %1293 = vmatprep.subr.bf16.mxu0 0
    %1294 = vmatpush1.bf16.msra.mxu0 %v1277
    %1295 = vmatprep.subr.bf16.mxu0 0
    %1296 = vmatpush1.bf16.msra.mxu0 %v1278
    %1297 = vmatprep.subr.bf16.mxu0 0
    %1298 = vmatpush1.bf16.msra.mxu0 %v1279
    %1299 = vmatprep.subr.bf16.mxu0 0
    %1300 = vmatpush1.bf16.msra.mxu0 %v1280
    %1301 = vmatprep.subr.bf16.mxu0 0
    %1302 = vmatpush1.bf16.msra.mxu0 %v1281
    %1303 = vmatprep.subr.bf16.mxu0 0
    %1304 = vmatpush1.bf16.msra.mxu0 %v1282
    %1305 = vmatprep.subr.bf16.mxu0 0
    %1306 = vmatpush1.bf16.msra.mxu0 %v1283
    %1307 = vmatprep.subr.bf16.mxu0 0
    %1308 = vmatpush1.bf16.msra.mxu0 %v1284
    %1309 = vmatprep.subr.bf16.mxu0 0
    %1310 = vmatpush1.bf16.msra.mxu0 0
    %1311 = vmatprep.subr.bf16.mxu0 0
    %1312 = vmatpush1.bf16.msra.mxu0 0
    %1313 = vmatprep.subr.bf16.mxu0 0
    %1314 = vmatpush1.bf16.msra.mxu0 0
    %1315 = vmatprep.subr.bf16.mxu0 0
    %1316 = vmatpush1.bf16.msra.mxu0 0
    %1317 = vmatprep.subr.bf16.mxu0 0
    %1318 = vmatpush1.bf16.msra.mxu0 0
    %1319 = vmatprep.subr.bf16.mxu0 0
    %1320 = vmatpush1.bf16.msra.mxu0 0
    %1321 = vmatprep.subr.bf16.mxu0 0
    %1322 = vmatpush1.bf16.msra.mxu0 0
    %1323 = vmatprep.subr.bf16.mxu0 0
    %1324 = vmatpush1.bf16.msra.mxu0 0
    %1325 = vmatprep.mubr.bf16.mxu0 0
    %1326 = vmatmul.mubr.bf16.gmra.mrb[0].mxu0 %v1221
    %v1327 = vpop.f32.mrb[0].mxu0
    %v1328 = vadd.f32 %v1243, %v1327
    %v1329 = vpop.f32.mrb[0].mxu0
    %v1330 = vpop.f32.mrb[0].mxu0
    %v1331 = vpop.f32.mrb[0].mxu0
    %1332 = vdwg.mxu0
    %v1333 = vpack.c.bf16 %v1328, %v1328
    %1334 = vst [vmem:[#allocation10] sm:$0xf] %v1333
    // Predicated region
    $region46: #{tpu_custom_call.1} parent=1 // pred_check
      _
    $region47: #{tpu_custom_call.1} parent=1 // pred_check_branch
      %1336 = sbr.rel (0) target = $region49
    $region48: #{tpu_custom_call.1} parent=1 // pred_region
      %s1338 = ssub.s32 64, 64
      %1339 = vsyncadd [#allocation4], %s1338
      %s1341 = sshll.u32 [#allocation10], 4
      %s1342 = int_to_ptr.vmem [resolvable:$true] %s1341
      %1344 = dma.vmem_to_hbm [thread:$0]  %s1342, 64, %s7, [#allocation4]
    $region49: #{tpu_custom_call.1} parent=1 // pred_fallthru
      _
    // Predicated region
    $region50: #{tpu_custom_call.1} parent=1 // pred_check
      _
    $region51: #{tpu_custom_call.1} parent=1 // pred_check_branch
      %1346 = sbr.rel (0) target = $region53
    $region52: #{tpu_custom_call.1} parent=1 // pred_region
      %1347 = dma.done [#allocation4], 64
    $region53: #{tpu_custom_call.1} parent=1 // pred_fallthru
      _
    %1348 = vsyncpa [#allocation3], 1
    %1349 = vsyncpa [#allocation6], 1
    %1350 = vsyncpa [#allocation9], 1
    %1351 = vsyncpa [#allocation4], 1

</llo_original>
